<compile_context>
chip_gen: v5e
topology: v5e:2x2
jax: 0.10.0
libtpu: 0.0.40
codegen_flags: <defaults>
</compile_context>

<pallas_src>
import jax
import jax.numpy as jnp
from jax.experimental import pallas as pl
from jax.experimental.pallas import tpu as pltpu


def _round_up(a: int, b: int) -> int:
    return (a + b - 1) // b * b


def _conv1d_kernel(x_ref, w_ref, b_ref, o_ref, acc_ref):
    # x_ref: (tm, tk), w_ref: (tk, tn), b_ref: (1, tn), o_ref: (tm, tn)
    # acc_ref: (tm, tn) f32 scratch, resident across the (innermost) K axis.
    k = pl.program_id(2)

    @pl.when(k == 0)
    def _():
        acc_ref[...] = jnp.zeros_like(acc_ref)

    acc_ref[...] += jnp.dot(
        x_ref[...], w_ref[...], preferred_element_type=jnp.float32
    )

    @pl.when(k == pl.num_programs(2) - 1)
    def _():
        # f32 epilogue (bias add), single cast to the output dtype.
        o_ref[...] = (acc_ref[...] + b_ref[...].astype(jnp.float32)).astype(
            o_ref.dtype
        )


def conv1d(x, weight, bias, *, tm=256, tn=256, tk=512, compute_dtype=None):
    """y = x @ weight + bias, matching torch addmm semantics of Conv1D."""
    nx, nf = weight.shape
    orig_shape = x.shape
    assert orig_shape[-1] == nx
    out_dtype = x.dtype

    if compute_dtype is not None:
        # e.g. jnp.bfloat16 on v6e/v7x for ~2x MXU + HBM headroom; accumulation
        # and the bias epilogue stay in f32 either way.
        x = x.astype(compute_dtype)
        weight = weight.astype(compute_dtype)

    x2d = x.reshape(-1, nx)
    M = x2d.shape[0]

    # --- tile sizing: clamp to problem size, keep (sublane, lane) alignment ---
    in_itemsize = jnp.dtype(x2d.dtype).itemsize
    pack = max(8, 32 // in_itemsize)  # 8 for f32, 16 for bf16
    tm = _round_up(min(tm, _round_up(M, pack)), pack)
    tn = _round_up(min(tn, _round_up(nf, 128)), 128)
    tk = _round_up(min(tk, _round_up(nx, 128)), 128)

    # --- pad every operand to tile multiples (replaces the old M % tm assert) --
    Mp, Kp, Np = _round_up(M, tm), _round_up(nx, tk), _round_up(nf, tn)
    if (Mp, Kp) != (M, nx):
        x2d = jnp.pad(x2d, ((0, Mp - M), (0, Kp - nx)))
    w = weight
    if (Kp, Np) != (nx, nf):
        w = jnp.pad(w, ((0, Kp - nx), (0, Np - nf)))
    b2d = bias.reshape(1, nf)
    if Np != nf:
        b2d = jnp.pad(b2d, ((0, 0), (0, Np - nf)))

    # nf outermost (weight/bias column resident across the inner M sweep when
    # K fits one tile), M middle, K (reduction) innermost.
    grid = (Np // tn, Mp // tm, Kp // tk)

    # --- explicit scoped-VMEM budget: double-buffered tiles + f32 accumulator --
    out_itemsize = jnp.dtype(out_dtype).itemsize
    needed = (
        2 * (tm * tk * in_itemsize + tk * tn * in_itemsize
             + tn * in_itemsize + tm * tn * out_itemsize)
        + tm * tn * 4
    )
    vmem_limit = int(min(48 * 1024 * 1024, max(2 * needed, 32 * 1024 * 1024)))

    cost = pl.CostEstimate(
        flops=2 * M * nx * nf,
        transcendentals=0,
        bytes_accessed=(M * nx + nx * nf + nf) * in_itemsize + M * nf * out_itemsize,
    )

    out = pl.pallas_call(
        _conv1d_kernel,
        out_shape=jax.ShapeDtypeStruct((Mp, Np), out_dtype),
        grid_spec=pltpu.PrefetchScalarGridSpec(
            num_scalar_prefetch=0,
            grid=grid,
            in_specs=[
                pl.BlockSpec((tm, tk), lambda j, i, k: (i, k)),  # x row tile
                pl.BlockSpec((tk, tn), lambda j, i, k: (k, j)),  # weight col tile
                pl.BlockSpec((1, tn), lambda j, i, k: (0, j)),   # bias col tile
            ],
            out_specs=pl.BlockSpec((tm, tn), lambda j, i, k: (i, j)),
            scratch_shapes=[pltpu.VMEM((tm, tn), jnp.float32)],
        ),
        compiler_params=pltpu.CompilerParams(
            dimension_semantics=("parallel", "parallel", "arbitrary"),
            vmem_limit_bytes=vmem_limit,
        ),
        cost_estimate=cost,
    )(x2d, w, b2d)

    out = out[:M, :nf]
    return out.reshape(orig_shape[:-1] + (nf,))


if __name__ == "__main__":
    key = jax.random.PRNGKey(0)
    k1, k2, k3, k4, k5 = jax.random.split(key, 5)

    # --- test 1: module-style shapes, zero bias (mirrors nn.init) -------------
    batch, seq, nx, nf = 2, 8, 128, 128
    weight = 0.02 * jax.random.normal(k1, (nx, nf), dtype=jnp.float32)
    bias = jnp.zeros((nf,), dtype=jnp.float32)
    x = jax.random.normal(k2, (batch, seq, nx), dtype=jnp.float32)

    y = conv1d(x, weight, bias)
    jax.block_until_ready(y)
    y_ref = (x.reshape(-1, nx) @ weight + bias).reshape(batch, seq, nf)
    assert y.shape == (batch, seq, nf)
    assert jnp.allclose(y, y_ref, atol=2e-5, rtol=2e-5)

    # --- test 2: ragged shapes + nonzero bias; exercises padding and the full
    #             3-axis (nf, M, K) grid with the f32 accumulator. -------------
    b2, s2, nx2, nf2 = 3, 7, 160, 200
    w2 = 0.02 * jax.random.normal(k3, (nx2, nf2), dtype=jnp.float32)
    bias2 = 0.1 * jax.random.normal(k4, (nf2,), dtype=jnp.float32)
    x2 = jax.random.normal(k5, (b2, s2, nx2), dtype=jnp.float32)

    y2 = conv1d(x2, w2, bias2, tm=16, tn=128, tk=128)
    jax.block_until_ready(y2)
    y2_ref = (x2.reshape(-1, nx2) @ w2 + bias2).reshape(b2, s2, nf2)
    assert y2.shape == (b2, s2, nf2)
    assert jnp.allclose(y2, y2_ref, atol=2e-5, rtol=2e-5)

    print("KERNEL_OK")
</pallas_src>

<mosaic_0001>
module attributes {stable_mosaic.version = 11 : i64} {
  func.func @_conv1d_kernel(%arg0: i32, %arg1: i32, %arg2: i32, %arg3: memref<16x128xf32, #tpu.memory_space<vmem>>, %arg4: memref<128x128xf32, #tpu.memory_space<vmem>>, %arg5: memref<1x128xf32, #tpu.memory_space<vmem>>, %arg6: memref<16x128xf32, #tpu.memory_space<vmem>>, %arg7: memref<16x128xf32, #tpu.memory_space<vmem>>) attributes {dimension_semantics = [#tpu.dimension_semantics<parallel>, #tpu.dimension_semantics<parallel>, #tpu.dimension_semantics<arbitrary>], iteration_bounds = array<i64: 1, 1, 1>, scalar_prefetch = 0 : i64, scratch_operands = 1 : i64, tpu.core_type = #tpu.core_type<tc>, window_params = [{transform_indices = @transform_0, window_bounds = array<i64: 16, 128>}, {transform_indices = @transform_1, window_bounds = array<i64: 128, 128>}, {transform_indices = @transform_2, window_bounds = array<i64: 1, 128>}, {transform_indices = @transform_3, window_bounds = array<i64: 16, 128>}]} {
    %c0_i32 = arith.constant 0 : i32
    %0 = arith.cmpi eq, %arg2, %c0_i32 : i32
    %1 = arith.extui %0 : i1 to i32
    %c0_i32_0 = arith.constant 0 : i32
    %2 = arith.cmpi ne, %1, %c0_i32_0 : i32
    scf.if %2 {
      %cst_10 = arith.constant 0.000000e+00 : f32
      %12 = vector.broadcast %cst_10 : f32 to vector<16x128xf32>
      %c0_11 = arith.constant 0 : index
      %c0_12 = arith.constant 0 : index
      %13 = vector.load %arg7[%c0_11, %c0_12] : memref<16x128xf32, #tpu.memory_space<vmem>>, vector<16x128xf32>
      tpu.vector_store %arg7[%c0_11, %c0_12], %12 {strides = array<i32>} : memref<16x128xf32, #tpu.memory_space<vmem>>, vector<16x128xf32>,
    } else {
    }
    %c0 = arith.constant 0 : index
    %c0_1 = arith.constant 0 : index
    %3 = vector.load %arg7[%c0, %c0_1] : memref<16x128xf32, #tpu.memory_space<vmem>>, vector<16x128xf32>
    %c0_2 = arith.constant 0 : index
    %c0_3 = arith.constant 0 : index
    %4 = vector.load %arg3[%c0_2, %c0_3] : memref<16x128xf32, #tpu.memory_space<vmem>>, vector<16x128xf32>
    %c0_4 = arith.constant 0 : index
    %c0_5 = arith.constant 0 : index
    %5 = vector.load %arg4[%c0_4, %c0_5] : memref<128x128xf32, #tpu.memory_space<vmem>>, vector<128x128xf32>
    %cst = arith.constant dense<0.000000e+00> : vector<16x128xf32>
    %6 = tpu.matmul %4, %5, %cst {dimension_numbers = #tpu.dot_dimension_numbers<[1], [0], [0], [1], [0, 0, 1, 1], [], []>} : vector<16x128xf32>, vector<128x128xf32>, vector<16x128xf32> -> vector<16x128xf32>
    %7 = arith.addf %3, %6 : vector<16x128xf32>
    %c0_6 = arith.constant 0 : index
    %c0_7 = arith.constant 0 : index
    %8 = vector.load %arg7[%c0_6, %c0_7] : memref<16x128xf32, #tpu.memory_space<vmem>>, vector<16x128xf32>
    tpu.vector_store %arg7[%c0_6, %c0_7], %7 {strides = array<i32>} : memref<16x128xf32, #tpu.memory_space<vmem>>, vector<16x128xf32>,
    %c0_i32_8 = arith.constant 0 : i32
    %9 = arith.cmpi eq, %arg2, %c0_i32_8 : i32
    %10 = arith.extui %9 : i1 to i32
    %c0_i32_9 = arith.constant 0 : i32
    %11 = arith.cmpi ne, %10, %c0_i32_9 : i32
    scf.if %11 {
      %c0_10 = arith.constant 0 : index
      %c0_11 = arith.constant 0 : index
      %12 = vector.load %arg7[%c0_10, %c0_11] : memref<16x128xf32, #tpu.memory_space<vmem>>, vector<16x128xf32>
      %c0_12 = arith.constant 0 : index
      %c0_13 = arith.constant 0 : index
      %13 = vector.load %arg5[%c0_12, %c0_13] : memref<1x128xf32, #tpu.memory_space<vmem>>, vector<1x128xf32>
      %14 = vector.broadcast %13 : vector<1x128xf32> to vector<16x128xf32>
      %15 = arith.addf %12, %14 : vector<16x128xf32>
      %c0_14 = arith.constant 0 : index
      %c0_15 = arith.constant 0 : index
      %16 = vector.load %arg6[%c0_14, %c0_15] : memref<16x128xf32, #tpu.memory_space<vmem>>, vector<16x128xf32>
      tpu.vector_store %arg6[%c0_14, %c0_15], %15 {strides = array<i32>} : memref<16x128xf32, #tpu.memory_space<vmem>>, vector<16x128xf32>,
    } else {
    }
    return
  }
  func.func @transform_0(%arg0: i32, %arg1: i32, %arg2: i32) -> (i32, i32) {
    %c0_i32 = arith.constant 0 : i32
    return %arg1, %arg2 : i32, i32
  }
  func.func @transform_1(%arg0: i32, %arg1: i32, %arg2: i32) -> (i32, i32) {
    %c0_i32 = arith.constant 0 : i32
    return %arg2, %arg0 : i32, i32
  }
  func.func @transform_2(%arg0: i32, %arg1: i32, %arg2: i32) -> (i32, i32) {
    %c0_i32 = arith.constant 0 : i32
    %c0_i32_0 = arith.constant 0 : i32
    return %c0_i32, %arg0 : i32, i32
  }
  func.func @transform_3(%arg0: i32, %arg1: i32, %arg2: i32) -> (i32, i32) {
    %c0_i32 = arith.constant 0 : i32
    return %arg1, %arg0 : i32, i32
  }
}

</mosaic_0001>

<llo_original>
// kernel: tpu_custom_call.1
$region0: #{tpu_custom_call.1}
  #allocation0 [shape = 'u32[]', space=smem, size = 0x4, offset = 0x4, fixed_abs, tag = 'smem constant byte address 0x4 - core index']
  #allocation1 [shape = 'u32[72,128]{1,0:T(1,128)}', space=vmem, size = 0x9000, scoped, tag = 'internal scratch']
  #allocation2 [shape = 'f32[16,128]{1,0:T(8,128)}', space=vmem, size = 0x2000, scoped, tag = 'scratch operand']
  %s0 = inlined_call_operand.hbm [shape: f32[16,128], index: 0, kind: input, shape index: {}]
  %s1 = inlined_call_operand.hbm [shape: f32[128,128], index: 1, kind: input, shape index: {}]
  %s2 = inlined_call_operand.vmem [shape: f32[1,128], index: 2, kind: input, shape index: {}]
  %s3 = inlined_call_operand.hbm [shape: f32[16,128], index: 3, kind: output, shape index: {}]
  %s4 = sld [smem:[#allocation0]]
  $region38: #{tpu_custom_call.1} parent=0
    _
  %s6 = ssub.s32 1, %s4
  %s7 = scalar_select 0, %s6, %s4
  $region1: #{tpu_custom_call.1} parent=0
    #allocation3 [shape = 'u8[8192]{0}', space=vmem, size = 0x2000, scoped, tag = 'input window, operand 0, single buffered']
    #allocation4 [shape = 's32[1]{0}', space=sflag, size = 0x4, scoped, tag = 'scoped memory for tpu_custom_call.1']
    #allocation5 [shape = 's32[1]{0}', space=sflag, size = 0x4, scoped, tag = 'scoped memory for tpu_custom_call.1']
    #allocation6 [shape = 'u8[65536]{0}', space=vmem, size = 0x10000, scoped, tag = 'input window, operand 1, single buffered']
    #allocation7 [shape = 's32[1]{0}', space=sflag, size = 0x4, scoped, tag = 'scoped memory for tpu_custom_call.1']
    #allocation8 [shape = 'u8[8192]{0}', space=vmem, size = 0x2000, scoped, tag = 'output window, operand 0, single buffered']
    %8 = vsyncpa [#allocation4], 0
    %9 = vsyncpa [#allocation7], 0
    %10 = vsyncpa [#allocation5], 0
    // Predicated region
    $region2: #{tpu_custom_call.1} parent=1 // pred_check
      _
    $region3: #{tpu_custom_call.1} parent=1 // pred_check_branch
      %12 = sbr.rel (0) target = $region5
    $region4: #{tpu_custom_call.1} parent=1 // pred_region
      %14 = vsyncadd [#allocation4], 0
      %s15 = sshll.u32 %s0, 4
      %s16 = int_to_ptr.hbm [resolvable:$true] %s15
      %s17 = sshll.u32 [#allocation3], 4
      %s18 = int_to_ptr.vmem [resolvable:$true] %s17
      %23 = dma.hbm_to_vmem [thread:$0]  %s16, 256, %s18, [#allocation4], 128, 128, 8
    $region5: #{tpu_custom_call.1} parent=1 // pred_fallthru
      _
    // Predicated region
    $region6: #{tpu_custom_call.1} parent=1 // pred_check
      _
    $region7: #{tpu_custom_call.1} parent=1 // pred_check_branch
      %25 = sbr.rel (0) target = $region9
    $region8: #{tpu_custom_call.1} parent=1 // pred_region
      %27 = vsyncadd [#allocation7], 0
      %s28 = sshll.u32 %s1, 4
      %s29 = int_to_ptr.hbm [resolvable:$true] %s28
      %s30 = sshll.u32 [#allocation6], 4
      %s31 = int_to_ptr.vmem [resolvable:$true] %s30
      %36 = dma.hbm_to_vmem [thread:$0]  %s29, 2048, %s31, [#allocation7], 128, 128, 8
    $region9: #{tpu_custom_call.1} parent=1 // pred_fallthru
      _
    // Predicated region
    $region10: #{tpu_custom_call.1} parent=1 // pred_check
      _
    $region11: #{tpu_custom_call.1} parent=1 // pred_check_branch
      %38 = sbr.rel (0) target = $region13
    $region12: #{tpu_custom_call.1} parent=1 // pred_region
      _
    $region13: #{tpu_custom_call.1} parent=1 // pred_fallthru
      _
    // Predicated region
    $region14: #{tpu_custom_call.1} parent=1 // pred_check
      _
    $region15: #{tpu_custom_call.1} parent=1 // pred_check_branch
      %40 = sbr.rel (0) target = $region17
    $region16: #{tpu_custom_call.1} parent=1 // pred_region
      %42 = dma.done [#allocation4], 256
    $region17: #{tpu_custom_call.1} parent=1 // pred_fallthru
      _
    // Predicated region
    $region18: #{tpu_custom_call.1} parent=1 // pred_check
      _
    $region19: #{tpu_custom_call.1} parent=1 // pred_check_branch
      %44 = sbr.rel (0) target = $region21
    $region20: #{tpu_custom_call.1} parent=1 // pred_region
      %46 = dma.done [#allocation7], 2048
    $region21: #{tpu_custom_call.1} parent=1 // pred_fallthru
      _
    %p47 = scmp.eq.s32.totalorder 0, 0
    // Predicated region
    $region22: #{tpu_custom_call.1} parent=1 // pred_check
      %p48 = pneg %p47
    $region23: #{tpu_custom_call.1} parent=1 // pred_check_branch
      %50 = sbr.rel (%p48) target = $region25
    $region24: #{tpu_custom_call.1} parent=1 // pred_region
      %51 = vst [vmem:[#allocation2] sm:$0xff] 0.0
      %52 = vst [vmem:[#allocation2 + $0x8] sm:$0xff] 0.0
    $region25: #{tpu_custom_call.1} parent=1 // pred_fallthru
      _
    %v53 = vld [vmem:[#allocation2] sm:$0xff]
    %v54 = vld [vmem:[#allocation2 + $0x8] sm:$0xff]
    %v55 = vld [vmem:[#allocation3] sm:$0xff]
    %v56 = vld [vmem:[#allocation3 + $0x8] sm:$0xff]
    %v57 = vld [vmem:[#allocation6] sm:$0xff]
    %v58 = vld [vmem:[#allocation6 + $0x8] sm:$0xff]
    %v59 = vld [vmem:[#allocation6 + $0x10] sm:$0xff]
    %v60 = vld [vmem:[#allocation6 + $0x18] sm:$0xff]
    %v61 = vld [vmem:[#allocation6 + $0x20] sm:$0xff]
    %v62 = vld [vmem:[#allocation6 + $0x28] sm:$0xff]
    %v63 = vld [vmem:[#allocation6 + $0x30] sm:$0xff]
    %v64 = vld [vmem:[#allocation6 + $0x38] sm:$0xff]
    %v65 = vld [vmem:[#allocation6 + $0x40] sm:$0xff]
    %v66 = vld [vmem:[#allocation6 + $0x48] sm:$0xff]
    %v67 = vld [vmem:[#allocation6 + $0x50] sm:$0xff]
    %v68 = vld [vmem:[#allocation6 + $0x58] sm:$0xff]
    %v69 = vld [vmem:[#allocation6 + $0x60] sm:$0xff]
    %v70 = vld [vmem:[#allocation6 + $0x68] sm:$0xff]
    %v71 = vld [vmem:[#allocation6 + $0x70] sm:$0xff]
    %v72 = vld [vmem:[#allocation6 + $0x78] sm:$0xff]
    %73 = vmatpush.msra.mxu0 %v72
    %74 = vmatpush.msra.mxu0 %v71
    %75 = vmatpush.msra.mxu0 %v70
    %76 = vmatpush.msra.mxu0 %v69
    %77 = vmatpush.msra.mxu0 %v68
    %78 = vmatpush.msra.mxu0 %v67
    %79 = vmatpush.msra.mxu0 %v66
    %80 = vmatpush.msra.mxu0 %v65
    %81 = vmatpush.msra.mxu0 %v64
    %82 = vmatpush.msra.mxu0 %v63
    %83 = vmatpush.msra.mxu0 %v62
    %84 = vmatpush.msra.mxu0 %v61
    %85 = vmatpush.msra.mxu0 %v60
    %86 = vmatpush.msra.mxu0 %v59
    %87 = vmatpush.msra.mxu0 %v58
    %88 = vmatpush.msra.mxu0 %v57
    %89 = vmatmul.f32.gmra.mxu0 %v55
    %v90 = vpop.f32.mrf.mxu0
    %v91 = vadd.f32 0.0, %v90
    %92 = vmatmul.f32.gmra.mxu0 %v56
    %v93 = vpop.f32.mrf.mxu0
    %v94 = vadd.f32 0.0, %v93
    %95 = vdwg.mxu0
    %v96 = vadd.f32 %v53, %v91
    %v97 = vadd.f32 %v54, %v94
    %98 = vst [vmem:[#allocation2] sm:$0xff] %v96
    %99 = vst [vmem:[#allocation2 + $0x8] sm:$0xff] %v97
    // Predicated region
    $region26: #{tpu_custom_call.1} parent=1 // pred_check
      %p100 = pneg %p47
    $region27: #{tpu_custom_call.1} parent=1 // pred_check_branch
      %102 = sbr.rel (%p100) target = $region29
    $region28: #{tpu_custom_call.1} parent=1 // pred_region
      %v103 = vld [vmem:[#allocation2] sm:$0xff]
      %v104 = vld [vmem:[#allocation2 + $0x8] sm:$0xff]
      %v105 = vld [vmem:[%s2] sm:$0x1]
      %v107 = vperm.slane %v105, 0
      %v109 = vadd.f32 %v103, %v107
      %v110 = vadd.f32 %v104, %v107
      %111 = vst [vmem:[#allocation8] sm:$0xff] %v109
      %112 = vst [vmem:[#allocation8 + $0x8] sm:$0xff] %v110
    $region29: #{tpu_custom_call.1} parent=1 // pred_fallthru
      _
    // Predicated region
    $region30: #{tpu_custom_call.1} parent=1 // pred_check
      _
    $region31: #{tpu_custom_call.1} parent=1 // pred_check_branch
      %114 = sbr.rel (0) target = $region33
    $region32: #{tpu_custom_call.1} parent=1 // pred_region
      %116 = vsyncadd [#allocation5], 0
      %s117 = sshll.u32 [#allocation8], 4
      %s118 = int_to_ptr.vmem [resolvable:$true] %s117
      %s119 = sshll.u32 %s3, 4
      %s120 = int_to_ptr.hbm [resolvable:$true] %s119
      %125 = dma.vmem_to_hbm [thread:$0]  %s118, 256, %s120, [#allocation5], 128, 128, 8
    $region33: #{tpu_custom_call.1} parent=1 // pred_fallthru
      _
    // Predicated region
    $region34: #{tpu_custom_call.1} parent=1 // pred_check
      _
    $region35: #{tpu_custom_call.1} parent=1 // pred_check_branch
      %127 = sbr.rel (0) target = $region37
    $region36: #{tpu_custom_call.1} parent=1 // pred_region
      %129 = dma.done [#allocation5], 256
    $region37: #{tpu_custom_call.1} parent=1 // pred_fallthru
      _
    %130 = vsyncpa [#allocation4], 1
    %131 = vsyncpa [#allocation7], 1
    %132 = vsyncpa [#allocation5], 1

</llo_original>
